<compile_context>
chip_gen: v7x
topology: tpu7x:2x2x1
jax: 0.10.0
libtpu: 0.0.40
codegen_flags: <defaults>
</compile_context>

<pallas_src>
import functools

import jax
import jax.numpy as jnp
from jax.experimental import pallas as pl
from jax.experimental.pallas import tpu as pltpu


# ---------------------------------------------------------------------------
# Kernel body (shared by both paths).
#   s_ref:  (TB, state_dim)      w1_ref: (state_dim, hidden)   b1_ref: (1, hidden)
#   w2_ref: (hidden, action_dim) b2_ref: (1, action_dim)       a_ref:  (TB, action_dim)
# ---------------------------------------------------------------------------
def _actor_kernel(s_ref, w1_ref, b1_ref, w2_ref, b2_ref, a_ref, *, max_action):
    h = jnp.tanh(
        jnp.dot(s_ref[...], w1_ref[...], preferred_element_type=jnp.float32)
        + b1_ref[...]
    )
    a_ref[...] = max_action * jnp.tanh(
        jnp.dot(h, w2_ref[...], preferred_element_type=jnp.float32)
        + b2_ref[...]
    )


# ---------------------------------------------------------------------------
# One-time parameter layout conversion (do this at init, NOT per forward call).
# Torch nn.Linear stores W as (out, in) and b as (out,); the kernel wants
# (in, out) row-major weights and 2-D (1, out) biases.
# ---------------------------------------------------------------------------
def prepare_actor_params(w1, b1, w2, b2):
    return (
        jnp.asarray(w1, jnp.float32).T,               # (state_dim, hidden)
        jnp.asarray(b1, jnp.float32).reshape(1, -1),  # (1, hidden)
        jnp.asarray(w2, jnp.float32).T,               # (hidden, action_dim)
        jnp.asarray(b2, jnp.float32).reshape(1, -1),  # (1, action_dim)
    )


_BATCH_TILE = 512  # rows per grid step on the large-batch path (>=512 ~ HBM roofline)


def _actor_forward_small(s, w1_t, b1_2d, w2_t, b2_2d, *, max_action):
    """B small: single kernel invocation, no grid, everything VMEM-resident."""
    B = s.shape[0]
    action_dim = w2_t.shape[1]
    kernel = functools.partial(_actor_kernel, max_action=max_action)
    vmem_spec = lambda: pl.BlockSpec(memory_space=pltpu.MemorySpace.VMEM)
    return pl.pallas_call(
        kernel,
        out_shape=jax.ShapeDtypeStruct((B, action_dim), jnp.float32),
        in_specs=[vmem_spec() for _ in range(5)],
        out_specs=vmem_spec(),
    )(s, w1_t, b1_2d, w2_t, b2_2d)


def _actor_forward_tiled(s, w1_t, b1_2d, w2_t, b2_2d, *, max_action, tb):
    """B large: batch-tiled grid; weights/biases stay resident across steps."""
    B, state_dim = s.shape
    hidden = w1_t.shape[1]
    action_dim = w2_t.shape[1]

    pad = (-B) % tb
    if pad:
        s = jnp.pad(s, ((0, pad), (0, 0)))
    Bp = B + pad

    kernel = functools.partial(_actor_kernel, max_action=max_action)
    # Note: output last dim (action_dim=4) is < 128 lanes, so stores are masked
    # vst.msk. If B grows into the many-thousands, a lane-dense output layout
    # (pad action_dim to 128 and slice outside) is the next lever.
    out = pl.pallas_call(
        kernel,
        out_shape=jax.ShapeDtypeStruct((Bp, action_dim), jnp.float32),
        grid=(Bp // tb,),
        in_specs=[
            pl.BlockSpec((tb, state_dim), lambda i: (i, 0)),       # streamed
            pl.BlockSpec((state_dim, hidden), lambda i: (0, 0)),   # resident
            pl.BlockSpec((1, hidden), lambda i: (0, 0)),           # resident
            pl.BlockSpec((hidden, action_dim), lambda i: (0, 0)),  # resident
            pl.BlockSpec((1, action_dim), lambda i: (0, 0)),       # resident
        ],
        out_specs=pl.BlockSpec((tb, action_dim), lambda i: (i, 0)),
        compiler_params=pltpu.CompilerParams(
            # Batch rows are independent -> shard across both TCs on v7x.
            dimension_semantics=("parallel",),
        ),
    )(s, w1_t, b1_2d, w2_t, b2_2d)
    return out[:B] if pad else out


def actor_forward(s, w1_t, b1_2d, w2_t, b2_2d, *, max_action):
    """Forward pass. Params must already be in kernel layout (prepare_actor_params)."""
    B = s.shape[0]
    if B <= _BATCH_TILE:
        return _actor_forward_small(s, w1_t, b1_2d, w2_t, b2_2d,
                                    max_action=max_action)
    return _actor_forward_tiled(s, w1_t, b1_2d, w2_t, b2_2d,
                                max_action=max_action, tb=_BATCH_TILE)


# Jitted entry point: no per-call layout ops, shape-specialized dispatch.
actor_apply = jax.jit(actor_forward, static_argnames=("max_action",))


def reference_forward(s, w1, b1, w2, b2, max_action):
    h = jnp.tanh(s @ w1.T + b1)
    return max_action * jnp.tanh(h @ w2.T + b2)


if __name__ == "__main__":
    # Shapes consistent with the module: state_dim=12, hidden=32, action_dim=4.
    state_dim, hidden_width, action_dim = 12, 32, 4
    max_action = 2.0

    key = jax.random.PRNGKey(0)
    k_s, k_w1, k_b1, k_w2, k_b2, k_big = jax.random.split(key, 6)

    # Torch-layout synthetic params: W (out, in), b (out,)
    w1 = jax.random.normal(k_w1, (hidden_width, state_dim), dtype=jnp.float32) * 0.1
    b1 = jax.random.normal(k_b1, (hidden_width,), dtype=jnp.float32) * 0.1
    w2 = jax.random.normal(k_w2, (action_dim, hidden_width), dtype=jnp.float32) * 0.1
    b2 = jax.random.normal(k_b2, (action_dim,), dtype=jnp.float32) * 0.1

    # One-time layout conversion (hoisted out of the call path).
    params = prepare_actor_params(w1, b1, w2, b2)

    # --- small-batch path (B=8): no-grid, fully VMEM-resident kernel ---------
    s_small = jax.random.normal(k_s, (8, state_dim), dtype=jnp.float32)
    a_small = jax.block_until_ready(
        actor_apply(s_small, *params, max_action=max_action))
    a_small_ref = reference_forward(s_small, w1, b1, w2, b2, max_action)
    assert a_small.shape == (8, action_dim)
    assert jnp.allclose(a_small, a_small_ref, atol=1e-5, rtol=1e-5)

    # --- large-batch path (B=1000): batch-tiled grid, parallel on v7x --------
    s_big = jax.random.normal(k_big, (1000, state_dim), dtype=jnp.float32)
    a_big = jax.block_until_ready(
        actor_apply(s_big, *params, max_action=max_action))
    a_big_ref = reference_forward(s_big, w1, b1, w2, b2, max_action)
    assert a_big.shape == (1000, action_dim)
    assert jnp.allclose(a_big, a_big_ref, atol=1e-5, rtol=1e-5)

    print("KERNEL_OK")
</pallas_src>

<mosaic_0001>
module attributes {stable_mosaic.version = 11 : i64} {
  func.func @_actor_kernel(%arg0: memref<8x12xf32, #tpu.memory_space<vmem>>, %arg1: memref<12x32xf32, #tpu.memory_space<vmem>>, %arg2: memref<1x32xf32, #tpu.memory_space<vmem>>, %arg3: memref<32x4xf32, #tpu.memory_space<vmem>>, %arg4: memref<1x4xf32, #tpu.memory_space<vmem>>, %arg5: memref<8x4xf32, #tpu.memory_space<vmem>>) attributes {dimension_semantics = [], scalar_prefetch = 0 : i64, scratch_operands = 0 : i64, tpu.core_type = #tpu.core_type<tc>} {
    %c0 = arith.constant 0 : index
    %c0_0 = arith.constant 0 : index
    %0 = vector.load %arg0[%c0, %c0_0] : memref<8x12xf32, #tpu.memory_space<vmem>>, vector<8x12xf32>
    %c0_1 = arith.constant 0 : index
    %c0_2 = arith.constant 0 : index
    %1 = vector.load %arg1[%c0_1, %c0_2] : memref<12x32xf32, #tpu.memory_space<vmem>>, vector<12x32xf32>
    %cst = arith.constant dense<0.000000e+00> : vector<8x32xf32>
    %2 = tpu.matmul %0, %1, %cst {dimension_numbers = #tpu.dot_dimension_numbers<[1], [0], [0], [1], [0, 0, 1, 1], [], []>} : vector<8x12xf32>, vector<12x32xf32>, vector<8x32xf32> -> vector<8x32xf32>
    %c0_3 = arith.constant 0 : index
    %c0_4 = arith.constant 0 : index
    %3 = vector.load %arg2[%c0_3, %c0_4] : memref<1x32xf32, #tpu.memory_space<vmem>>, vector<1x32xf32>
    %4 = vector.broadcast %3 : vector<1x32xf32> to vector<8x32xf32>
    %5 = arith.addf %2, %4 : vector<8x32xf32>
    %6 = math.tanh %5 : vector<8x32xf32>
    %c0_5 = arith.constant 0 : index
    %c0_6 = arith.constant 0 : index
    %7 = vector.load %arg3[%c0_5, %c0_6] : memref<32x4xf32, #tpu.memory_space<vmem>>, vector<32x4xf32>
    %cst_7 = arith.constant dense<0.000000e+00> : vector<8x4xf32>
    %8 = tpu.matmul %6, %7, %cst_7 {dimension_numbers = #tpu.dot_dimension_numbers<[1], [0], [0], [1], [0, 0, 1, 1], [], []>} : vector<8x32xf32>, vector<32x4xf32>, vector<8x4xf32> -> vector<8x4xf32>
    %c0_8 = arith.constant 0 : index
    %c0_9 = arith.constant 0 : index
    %9 = vector.load %arg4[%c0_8, %c0_9] : memref<1x4xf32, #tpu.memory_space<vmem>>, vector<1x4xf32>
    %10 = vector.broadcast %9 : vector<1x4xf32> to vector<8x4xf32>
    %11 = arith.addf %8, %10 : vector<8x4xf32>
    %12 = math.tanh %11 : vector<8x4xf32>
    %cst_10 = arith.constant 2.000000e+00 : f32
    %13 = vector.broadcast %cst_10 : f32 to vector<8x4xf32>
    %14 = arith.mulf %13, %12 : vector<8x4xf32>
    %c0_11 = arith.constant 0 : index
    %c0_12 = arith.constant 0 : index
    %15 = vector.load %arg5[%c0_11, %c0_12] : memref<8x4xf32, #tpu.memory_space<vmem>>, vector<8x4xf32>
    tpu.vector_store %arg5[%c0_11, %c0_12], %14 {strides = array<i32>} : memref<8x4xf32, #tpu.memory_space<vmem>>, vector<8x4xf32>,
    return
  }
}

</mosaic_0001>

<llo_original>
// kernel: actor_forward.1
$region0: #{actor_forward.1}
  #allocation0 [shape = 'u32[]', space=smem, size = 0x4, offset = 0x4, fixed_abs, tag = 'smem constant byte address 0x4 - core index']
  #allocation1 [shape = 'u32[144,128]{1,0:T(1,128)}', space=vmem, size = 0x12000, scoped, tag = 'internal scratch']
  %s0 = inlined_call_operand.vmem [shape: f32[8,12], index: 0, kind: input, shape index: {}]
  %s1 = inlined_call_operand.vmem [shape: f32[12,32], index: 1, kind: input, shape index: {}]
  %s2 = inlined_call_operand.vmem [shape: f32[1,32], index: 2, kind: input, shape index: {}]
  %s3 = inlined_call_operand.vmem [shape: f32[32,4], index: 3, kind: input, shape index: {}]
  %s4 = inlined_call_operand.vmem [shape: f32[1,4], index: 4, kind: input, shape index: {}]
  %s5 = inlined_call_operand.vmem [shape: f32[8,4], index: 5, kind: output, shape index: {}]
  %s6 = sld [smem:[#allocation0]]
  $region30: #{actor_forward.1} parent=0
    _
  %s8 = ssub.s32 1, %s6
  %s9 = scalar_select 0, %s8, %s6
  // Predicated region
  $region2: #{actor_forward.1} parent=0 // pred_check
    _
  $region3: #{actor_forward.1} parent=0 // pred_check_branch
    %11 = sbr.rel (0) target = $region5
  $region4: #{actor_forward.1} parent=0 // pred_region
    _
  $region5: #{actor_forward.1} parent=0 // pred_fallthru
    _
  // Predicated region
  $region6: #{actor_forward.1} parent=0 // pred_check
    _
  $region7: #{actor_forward.1} parent=0 // pred_check_branch
    %13 = sbr.rel (0) target = $region9
  $region8: #{actor_forward.1} parent=0 // pred_region
    _
  $region9: #{actor_forward.1} parent=0 // pred_fallthru
    _
  // Predicated region
  $region10: #{actor_forward.1} parent=0 // pred_check
    _
  $region11: #{actor_forward.1} parent=0 // pred_check_branch
    %15 = sbr.rel (0) target = $region13
  $region12: #{actor_forward.1} parent=0 // pred_region
    _
  $region13: #{actor_forward.1} parent=0 // pred_fallthru
    _
  // Predicated region
  $region14: #{actor_forward.1} parent=0 // pred_check
    _
  $region15: #{actor_forward.1} parent=0 // pred_check_branch
    %17 = sbr.rel (0) target = $region17
  $region16: #{actor_forward.1} parent=0 // pred_region
    _
  $region17: #{actor_forward.1} parent=0 // pred_fallthru
    _
  // Predicated region
  $region18: #{actor_forward.1} parent=0 // pred_check
    _
  $region19: #{actor_forward.1} parent=0 // pred_check_branch
    %19 = sbr.rel (0) target = $region21
  $region20: #{actor_forward.1} parent=0 // pred_region
    _
  $region21: #{actor_forward.1} parent=0 // pred_fallthru
    _
  %v20 = vld [vmem:[%s0] sm:$0xff]
  %v21 = vld [vmem:[%s1] sm:$0xff]
  %v22 = vld [vmem:[%s1 + $0x8] sm:$0xf]
  %v23 = vld [vmem:[%s2] sm:$0x1]
  %v25 = vlaneseq
  %v26 = vshrl.u32 %v25, 7
  %v27 = vsub.s32 0, %v26
  %v28 = vrot.slane %v23, %v27
  %vm30 = vcmask 97280
  %v32 = vsel %vm30, %v20, 0
  %vm34 = vcmask 1043456
  %v36 = vsel %vm34, %v22, 0
  %38 = vmatprep.subr.mxu0 0.0
  %39 = vmatpush1.msra.mxu0 %v21
  %40 = vmatprep.subr.mxu0 0.0
  %41 = vmatpush1.msra.mxu0 %v36
  %42 = vmatprep.subr.mxu0 0.0
  %43 = vmatpush1.msra.mxu0 0.0
  %44 = vmatprep.subr.mxu0 0.0
  %45 = vmatpush1.msra.mxu0 0.0
  %46 = vmatprep.subr.mxu0 0.0
  %47 = vmatpush1.msra.mxu0 0.0
  %48 = vmatprep.subr.mxu0 0.0
  %49 = vmatpush1.msra.mxu0 0.0
  %50 = vmatprep.subr.mxu0 0.0
  %51 = vmatpush1.msra.mxu0 0.0
  %52 = vmatprep.subr.mxu0 0.0
  %53 = vmatpush1.msra.mxu0 0.0
  %54 = vmatprep.subr.mxu0 0.0
  %55 = vmatpush1.msra.mxu0 0.0
  %56 = vmatprep.subr.mxu0 0.0
  %57 = vmatpush1.msra.mxu0 0.0
  %58 = vmatprep.subr.mxu0 0.0
  %59 = vmatpush1.msra.mxu0 0.0
  %60 = vmatprep.subr.mxu0 0.0
  %61 = vmatpush1.msra.mxu0 0.0
  %62 = vmatprep.subr.mxu0 0.0
  %63 = vmatpush1.msra.mxu0 0.0
  %64 = vmatprep.subr.mxu0 0.0
  %65 = vmatpush1.msra.mxu0 0.0
  %66 = vmatprep.subr.mxu0 0.0
  %67 = vmatpush1.msra.mxu0 0.0
  %68 = vmatprep.subr.mxu0 0.0
  %69 = vmatpush1.msra.mxu0 0.0
  %70 = vmatprep.subr.mxu0 0.0
  %71 = vmatpush1.msra.mxu0 0.0
  %72 = vmatprep.subr.mxu0 0.0
  %73 = vmatpush1.msra.mxu0 0.0
  %74 = vmatprep.subr.mxu0 0.0
  %75 = vmatpush1.msra.mxu0 0.0
  %76 = vmatprep.subr.mxu0 0.0
  %77 = vmatpush1.msra.mxu0 0.0
  %78 = vmatprep.subr.mxu0 0.0
  %79 = vmatpush1.msra.mxu0 0.0
  %80 = vmatprep.subr.mxu0 0.0
  %81 = vmatpush1.msra.mxu0 0.0
  %82 = vmatprep.subr.mxu0 0.0
  %83 = vmatpush1.msra.mxu0 0.0
  %84 = vmatprep.subr.mxu0 0.0
  %85 = vmatpush1.msra.mxu0 0.0
  %86 = vmatprep.subr.mxu0 0.0
  %87 = vmatpush1.msra.mxu0 0.0
  %88 = vmatprep.subr.mxu0 0.0
  %89 = vmatpush1.msra.mxu0 0.0
  %90 = vmatprep.subr.mxu0 0.0
  %91 = vmatpush1.msra.mxu0 0.0
  %92 = vmatprep.subr.mxu0 0.0
  %93 = vmatpush1.msra.mxu0 0.0
  %94 = vmatprep.subr.mxu0 0.0
  %95 = vmatpush1.msra.mxu0 0.0
  %96 = vmatprep.subr.mxu0 0.0
  %97 = vmatpush1.msra.mxu0 0.0
  %98 = vmatprep.subr.mxu0 0.0
  %99 = vmatpush1.msra.mxu0 0.0
  %100 = vmatprep.subr.mxu0 0.0
  %101 = vmatpush1.msra.mxu0 0.0
  %102 = vmatprep.mubr.f32.mxu0 0.0
  %103 = vmatmul.mubr.f32.gmra.mrb[0].mxu0 %v32
  %v104 = vpop.f32.mrb[0].mxu0
  %v105 = vadd.f32 %v28, %v104
  %v106 = vpop.f32.mrb[0].mxu0
  %107 = vdwg.mxu0
  %v108 = vtanh.pop %v105
  %v109 = vld [vmem:[%s3] sm:$0xff]
  %v110 = vld [vmem:[%s3 + $0x8] sm:$0xff]
  %v111 = vld [vmem:[%s3 + $0x10] sm:$0xff]
  %v112 = vld [vmem:[%s3 + $0x18] sm:$0xff]
  %v113 = vld [vmem:[%s4] sm:$0x1]
  %v115 = vlaneseq
  %v116 = vshrl.u32 %v115, 7
  %v117 = vsub.s32 0, %v116
  %v118 = vrot.slane %v113, %v117
  %vm120 = vcmask 261120
  %v122 = vsel %vm120, %v108, 0
  %124 = vmatprep.subr.mxu0 0.0
  %125 = vmatpush1.msra.mxu0 %v109
  %126 = vmatprep.subr.mxu0 0.0
  %127 = vmatpush1.msra.mxu0 %v110
  %128 = vmatprep.subr.mxu0 0.0
  %129 = vmatpush1.msra.mxu0 %v111
  %130 = vmatprep.subr.mxu0 0.0
  %131 = vmatpush1.msra.mxu0 %v112
  %132 = vmatprep.subr.mxu0 0.0
  %133 = vmatpush1.msra.mxu0 0.0
  %134 = vmatprep.subr.mxu0 0.0
  %135 = vmatpush1.msra.mxu0 0.0
  %136 = vmatprep.subr.mxu0 0.0
  %137 = vmatpush1.msra.mxu0 0.0
  %138 = vmatprep.subr.mxu0 0.0
  %139 = vmatpush1.msra.mxu0 0.0
  %140 = vmatprep.subr.mxu0 0.0
  %141 = vmatpush1.msra.mxu0 0.0
  %142 = vmatprep.subr.mxu0 0.0
  %143 = vmatpush1.msra.mxu0 0.0
  %144 = vmatprep.subr.mxu0 0.0
  %145 = vmatpush1.msra.mxu0 0.0
  %146 = vmatprep.subr.mxu0 0.0
  %147 = vmatpush1.msra.mxu0 0.0
  %148 = vmatprep.subr.mxu0 0.0
  %149 = vmatpush1.msra.mxu0 0.0
  %150 = vmatprep.subr.mxu0 0.0
  %151 = vmatpush1.msra.mxu0 0.0
  %152 = vmatprep.subr.mxu0 0.0
  %153 = vmatpush1.msra.mxu0 0.0
  %154 = vmatprep.subr.mxu0 0.0
  %155 = vmatpush1.msra.mxu0 0.0
  %156 = vmatprep.subr.mxu0 0.0
  %157 = vmatpush1.msra.mxu0 0.0
  %158 = vmatprep.subr.mxu0 0.0
  %159 = vmatpush1.msra.mxu0 0.0
  %160 = vmatprep.subr.mxu0 0.0
  %161 = vmatpush1.msra.mxu0 0.0
  %162 = vmatprep.subr.mxu0 0.0
  %163 = vmatpush1.msra.mxu0 0.0
  %164 = vmatprep.subr.mxu0 0.0
  %165 = vmatpush1.msra.mxu0 0.0
  %166 = vmatprep.subr.mxu0 0.0
  %167 = vmatpush1.msra.mxu0 0.0
  %168 = vmatprep.subr.mxu0 0.0
  %169 = vmatpush1.msra.mxu0 0.0
  %170 = vmatprep.subr.mxu0 0.0
  %171 = vmatpush1.msra.mxu0 0.0
  %172 = vmatprep.subr.mxu0 0.0
  %173 = vmatpush1.msra.mxu0 0.0
  %174 = vmatprep.subr.mxu0 0.0
  %175 = vmatpush1.msra.mxu0 0.0
  %176 = vmatprep.subr.mxu0 0.0
  %177 = vmatpush1.msra.mxu0 0.0
  %178 = vmatprep.subr.mxu0 0.0
  %179 = vmatpush1.msra.mxu0 0.0
  %180 = vmatprep.subr.mxu0 0.0
  %181 = vmatpush1.msra.mxu0 0.0
  %182 = vmatprep.subr.mxu0 0.0
  %183 = vmatpush1.msra.mxu0 0.0
  %184 = vmatprep.subr.mxu0 0.0
  %185 = vmatpush1.msra.mxu0 0.0
  %186 = vmatprep.subr.mxu0 0.0
  %187 = vmatpush1.msra.mxu0 0.0
  %188 = vmatprep.mubr.f32.mxu0 0.0
  %189 = vmatmul.mubr.f32.gmra.mrb[0].mxu0 %v122
  %v190 = vpop.f32.mrb[0].mxu0
  %v191 = vadd.f32 %v118, %v190
  %v192 = vpop.f32.mrb[0].mxu0
  %193 = vdwg.mxu0
  %v194 = vtanh.pop %v191
  %v195 = vmul.f32 %v194, 2.0
  %vm196 = vcmask 31744
  %197 = vst.msk [vmem:[%s5] sm:$0xff] %vm196, %v195
  // Predicated region
  $region22: #{actor_forward.1} parent=0 // pred_check
    _
  $region23: #{actor_forward.1} parent=0 // pred_check_branch
    %199 = sbr.rel (0) target = $region25
  $region24: #{actor_forward.1} parent=0 // pred_region
    _
  $region25: #{actor_forward.1} parent=0 // pred_fallthru
    _
  // Predicated region
  $region26: #{actor_forward.1} parent=0 // pred_check
    _
  $region27: #{actor_forward.1} parent=0 // pred_check_branch
    %201 = sbr.rel (0) target = $region29
  $region28: #{actor_forward.1} parent=0 // pred_region
    _
  $region29: #{actor_forward.1} parent=0 // pred_fallthru
    _

</llo_original>
